<compile_context>
chip_gen: v7x
topology: tpu7x:2x2x1
jax: 0.10.0
libtpu: 0.0.40
codegen_flags: <defaults>
</compile_context>

<pallas_src>
import functools

import jax
import jax.numpy as jnp
from jax import lax
from jax.experimental import pallas as pl
from jax.experimental.pallas import tpu as pltpu

_LANE = 128
_SUBLANE = 8
_GRIDLESS_MAX_BATCH = 1024


def _round_up(n, m):
    return ((n + m - 1) // m) * m


def _default_bf16_sigmoid():
    """bf16 EUP/VPU path exists on v6e/v7x; keep f32 transcendentals earlier."""
    try:
        kind = jax.devices()[0].device_kind.lower()
    except Exception:
        return False
    for old in ("v2", "v3", "v4", "v5"):
        if old in kind:
            return False
    return True


def _dqn_kernel(x_ref, w1_ref, b1_ref, w2t_ref, b2t_ref, o_ref, *, bf16_sigmoid):
    # Layer 1: in-kernel f32->bf16 cast, bf16 MXU matmul, f32 accumulate + bias.
    x = x_ref[...].astype(jnp.bfloat16)
    h = jnp.dot(x, w1_ref[...], preferred_element_type=jnp.float32)
    h = h + b1_ref[...]

    # Sigmoid on the EUP; bf16 on v6e/v7x (half the transcendental work),
    # f32 on v5e (no bf16 EUP path).
    if bf16_sigmoid:
        hb = jax.nn.sigmoid(h.astype(jnp.bfloat16))
    else:
        hb = jax.nn.sigmoid(h).astype(jnp.bfloat16)

    # Layer 2, transposed: (a_pad, hidden) . (batch_tile, hidden)^T ->
    # (a_pad, batch_tile).  Last dim of the output block is the batch tile
    # (multiple of 128), so the store is unmasked and the result slab is tiny.
    out_t = lax.dot_general(
        w2t_ref[...], hb,
        dimension_numbers=(((1,), (1,)), ((), ())),
        preferred_element_type=jnp.float32)
    o_ref[...] = (out_t + b2t_ref[...]).astype(o_ref.dtype)


def prepare_params(w1, b1, w2, b2):
    """One-time parameter prep (hoisted out of the per-call hot path).

    Inputs:  w1 (state_dim, hidden), b1 (hidden,)/(1, hidden),
             w2 (hidden, action_dim), b2 (action_dim,)/(1, action_dim)
    Returns: w1b (state_dim, hidden) bf16, b1f (1, hidden) f32,
             w2t (8, hidden) bf16 (W2^T zero-padded to 8 sublanes),
             b2t (8, 1) f32.
    """
    hidden_dim, action_dim = w2.shape
    a_pad = _round_up(action_dim, _SUBLANE)
    w1b = jnp.asarray(w1, jnp.bfloat16)
    b1f = jnp.asarray(b1, jnp.float32).reshape(1, hidden_dim)
    w2t = jnp.zeros((a_pad, hidden_dim), jnp.bfloat16)
    w2t = w2t.at[:action_dim, :].set(jnp.asarray(w2, jnp.bfloat16).T)
    b2t = jnp.zeros((a_pad, 1), jnp.float32)
    b2t = b2t.at[:action_dim, 0].set(jnp.asarray(b2, jnp.float32).reshape(-1))
    return w1b, b1f, w2t, b2t


def _choose_batch_tile(batch):
    # Target >= 4 grid steps (v7x megacore + pipelining) with 1024-4096-row
    # tiles (multiples of 512) to amortize the ~0.35us per-grid-step overhead.
    bt = _round_up(pl.cdiv(batch, 4), 512)
    return max(1024, min(bt, 4096))


@functools.partial(
    jax.jit, static_argnames=("action_dim", "bf16_sigmoid", "batch_tile"))
def simple_dqn_forward(x, w1b, b1f, w2t, b2t, *, action_dim,
                       bf16_sigmoid=None, batch_tile=None):
    """Fused SimpleDQN forward: sigmoid(x @ W1 + b1) @ W2 + b2."""
    if bf16_sigmoid is None:
        bf16_sigmoid = _default_bf16_sigmoid()

    batch, state_dim = x.shape
    hidden_dim = w1b.shape[1]
    a_pad = w2t.shape[0]
    kernel = functools.partial(_dqn_kernel, bf16_sigmoid=bf16_sigmoid)
    out_shape = jax.ShapeDtypeStruct((a_pad, batch), jnp.float32)

    if batch <= _GRIDLESS_MAX_BATCH and batch_tile is None:
        # Small batch: single invocation, every operand a resident VMEM block,
        # no grid / no pipeline machinery / no double buffering.
        out_t = pl.pallas_call(
            kernel,
            out_shape=out_shape,
            in_specs=[pl.BlockSpec(memory_space=pltpu.MemorySpace.VMEM)] * 5,
            out_specs=pl.BlockSpec(memory_space=pltpu.MemorySpace.VMEM),
        )(x, w1b, b1f, w2t, b2t)
    else:
        bt = batch_tile if batch_tile is not None else _choose_batch_tile(batch)
        grid = (pl.cdiv(batch, bt),)   # ragged last block: no zero-pad copy of x
        out_t = pl.pallas_call(
            kernel,
            out_shape=out_shape,
            grid=grid,
            in_specs=[
                pl.BlockSpec((bt, state_dim), lambda i: (i, 0)),          # x (f32)
                pl.BlockSpec((state_dim, hidden_dim), lambda i: (0, 0)),  # W1 bf16
                pl.BlockSpec((1, hidden_dim), lambda i: (0, 0)),          # b1 f32
                pl.BlockSpec((a_pad, hidden_dim), lambda i: (0, 0)),      # W2^T bf16
                pl.BlockSpec((a_pad, 1), lambda i: (0, 0)),               # b2 f32
            ],
            out_specs=pl.BlockSpec((a_pad, bt), lambda i: (0, i)),
            compiler_params=pltpu.CompilerParams(
                dimension_semantics=("parallel",)),
        )(x, w1b, b1f, w2t, b2t)

    # Tiny fixup: drop the sublane padding and return (batch, action_dim).
    return out_t[:action_dim, :].T


def init_params(key, state_dim, action_dim, hidden_dim):
    """Deterministic init mimicking PyTorch nn.Linear default
    (U(-1/sqrt(fan_in), 1/sqrt(fan_in))), stored transposed vs. PyTorch."""
    k1, k2, k3, k4 = jax.random.split(key, 4)
    lim1 = 1.0 / jnp.sqrt(state_dim)
    lim2 = 1.0 / jnp.sqrt(hidden_dim)
    w1 = jax.random.uniform(k1, (state_dim, hidden_dim), jnp.float32, -lim1, lim1)
    b1 = jax.random.uniform(k2, (1, hidden_dim), jnp.float32, -lim1, lim1)
    w2 = jax.random.uniform(k3, (hidden_dim, action_dim), jnp.float32, -lim2, lim2)
    b2 = jax.random.uniform(k4, (1, action_dim), jnp.float32, -lim2, lim2)
    return w1, b1, w2, b2


def _reference(x, w1, b1, w2, b2):
    """Pure-JAX f32 reference matching the PyTorch module semantics."""
    h = jax.nn.sigmoid(jnp.dot(x, w1) + b1.reshape(1, -1))
    return jnp.dot(h, w2) + b2.reshape(1, -1)


if __name__ == "__main__":
    # Small shapes consistent with the module: x is (batch, state_dim).
    batch, state_dim, action_dim, hidden_dim = 8, 16, 4, 128

    key = jax.random.PRNGKey(0)
    kx, kp, kx_big = jax.random.split(key, 3)
    x = jax.random.normal(kx, (batch, state_dim), jnp.float32)
    w1, b1, w2, b2 = init_params(kp, state_dim, action_dim, hidden_dim)

    # One-time weight prep, outside the per-call hot path.
    params = prepare_params(w1, b1, w2, b2)

    # Small-batch (gridless, fully VMEM-resident) path.
    out = jax.block_until_ready(
        simple_dqn_forward(x, *params, action_dim=action_dim))
    ref = _reference(x, w1, b1, w2, b2)
    assert out.shape == (batch, action_dim)
    assert jnp.allclose(out, ref, atol=2e-2, rtol=2e-2), "small-batch mismatch"

    # Large-batch path: batch-tiled, "parallel" grid axis, ragged last block
    # (4136 is deliberately not a multiple of the tile size).
    big_batch = 4136
    x_big = jax.random.normal(kx_big, (big_batch, state_dim), jnp.float32)
    out_big = jax.block_until_ready(
        simple_dqn_forward(x_big, *params, action_dim=action_dim))
    ref_big = _reference(x_big, w1, b1, w2, b2)
    assert out_big.shape == (big_batch, action_dim)
    assert jnp.allclose(out_big, ref_big, atol=2e-2, rtol=2e-2), "tiled mismatch"

    print("KERNEL_OK")
</pallas_src>

<mosaic_0001>
module attributes {stable_mosaic.version = 11 : i64} {
  func.func @_dqn_kernel(%arg0: memref<8x16xf32, #tpu.memory_space<vmem>>, %arg1: memref<16x128xbf16, #tpu.memory_space<vmem>>, %arg2: memref<1x128xf32, #tpu.memory_space<vmem>>, %arg3: memref<8x128xbf16, #tpu.memory_space<vmem>>, %arg4: memref<8x1xf32, #tpu.memory_space<vmem>>, %arg5: memref<8x8xf32, #tpu.memory_space<vmem>>) attributes {dimension_semantics = [], scalar_prefetch = 0 : i64, scratch_operands = 0 : i64, tpu.core_type = #tpu.core_type<tc>} {
    %c0 = arith.constant 0 : index
    %c0_0 = arith.constant 0 : index
    %0 = vector.load %arg0[%c0, %c0_0] : memref<8x16xf32, #tpu.memory_space<vmem>>, vector<8x16xf32>
    %1 = arith.truncf %0 : vector<8x16xf32> to vector<8x16xbf16>
    %c0_1 = arith.constant 0 : index
    %c0_2 = arith.constant 0 : index
    %2 = vector.load %arg1[%c0_1, %c0_2] : memref<16x128xbf16, #tpu.memory_space<vmem>>, vector<16x128xbf16>
    %cst = arith.constant dense<0.000000e+00> : vector<8x128xf32>
    %3 = tpu.matmul %1, %2, %cst {dimension_numbers = #tpu.dot_dimension_numbers<[1], [0], [0], [1], [0, 0, 1, 1], [], []>} : vector<8x16xbf16>, vector<16x128xbf16>, vector<8x128xf32> -> vector<8x128xf32>
    %c0_3 = arith.constant 0 : index
    %c0_4 = arith.constant 0 : index
    %4 = vector.load %arg2[%c0_3, %c0_4] : memref<1x128xf32, #tpu.memory_space<vmem>>, vector<1x128xf32>
    %5 = vector.broadcast %4 : vector<1x128xf32> to vector<8x128xf32>
    %6 = arith.addf %3, %5 : vector<8x128xf32>
    %7 = arith.truncf %6 : vector<8x128xf32> to vector<8x128xbf16>
    %8 = arith.negf %7 : vector<8x128xbf16>
    %9 = math.exp %8 : vector<8x128xbf16>
    %cst_5 = arith.constant 1.000000e+00 : bf16
    %10 = vector.broadcast %cst_5 : bf16 to vector<8x128xbf16>
    %11 = arith.addf %10, %9 : vector<8x128xbf16>
    %12 = arith.divf %10, %11 : vector<8x128xbf16>
    %c0_6 = arith.constant 0 : index
    %c0_7 = arith.constant 0 : index
    %13 = vector.load %arg3[%c0_6, %c0_7] : memref<8x128xbf16, #tpu.memory_space<vmem>>, vector<8x128xbf16>
    %cst_8 = arith.constant dense<0.000000e+00> : vector<8x8xf32>
    %14 = tpu.matmul %13, %12, %cst_8 {dimension_numbers = #tpu.dot_dimension_numbers<[1], [1], [0], [0], [0, 0, 1, 0], [], []>} : vector<8x128xbf16>, vector<8x128xbf16>, vector<8x8xf32> -> vector<8x8xf32>
    %c0_9 = arith.constant 0 : index
    %c0_10 = arith.constant 0 : index
    %15 = vector.load %arg4[%c0_9, %c0_10] : memref<8x1xf32, #tpu.memory_space<vmem>>, vector<8x1xf32>
    %16 = vector.broadcast %15 : vector<8x1xf32> to vector<8x8xf32>
    %17 = arith.addf %14, %16 : vector<8x8xf32>
    %c0_11 = arith.constant 0 : index
    %c0_12 = arith.constant 0 : index
    %18 = vector.load %arg5[%c0_11, %c0_12] : memref<8x8xf32, #tpu.memory_space<vmem>>, vector<8x8xf32>
    tpu.vector_store %arg5[%c0_11, %c0_12], %17 {strides = array<i32>} : memref<8x8xf32, #tpu.memory_space<vmem>>, vector<8x8xf32>,
    return
  }
}

</mosaic_0001>

<llo_original>
// kernel: simple_dqn_forward.1
$region0: #{simple_dqn_forward.1}
  #allocation0 [shape = 'u32[]', space=smem, size = 0x4, offset = 0x4, fixed_abs, tag = 'smem constant byte address 0x4 - core index']
  #allocation1 [shape = 'u32[144,128]{1,0:T(1,128)}', space=vmem, size = 0x12000, scoped, tag = 'internal scratch']
  %s0 = inlined_call_operand.vmem [shape: f32[8,16], index: 0, kind: input, shape index: {}]
  %s1 = inlined_call_operand.hbm [shape: bf16[16,128], index: 1, kind: input, shape index: {}]
  %s2 = inlined_call_operand.vmem [shape: f32[1,128], index: 2, kind: input, shape index: {}]
  %s3 = inlined_call_operand.vmem [shape: bf16[8,128], index: 3, kind: input, shape index: {}]
  %s4 = inlined_call_operand.vmem [shape: f32[8,1], index: 4, kind: input, shape index: {}]
  %s5 = inlined_call_operand.vmem [shape: f32[8,8], index: 5, kind: output, shape index: {}]
  %s6 = sld [smem:[#allocation0]]
  $region34: #{simple_dqn_forward.1} parent=0
    _
  %s8 = ssub.s32 1, %s6
  %s9 = scalar_select 0, %s8, %s6
  $region1: #{simple_dqn_forward.1} parent=0
    #allocation2 [shape = 'u8[4096]{0}', space=vmem, size = 0x1000, scoped, tag = 'input window, operand 1, single buffered']
    #allocation3 [shape = 's32[1]{0}', space=sflag, size = 0x4, scoped, tag = 'scoped memory for simple_dqn_forward.1']
    %10 = vsyncpa [#allocation3], 0
    // Predicated region
    $region2: #{simple_dqn_forward.1} parent=1 // pred_check
      _
    $region3: #{simple_dqn_forward.1} parent=1 // pred_check_branch
      %12 = sbr.rel (0) target = $region5
    $region4: #{simple_dqn_forward.1} parent=1 // pred_region
      _
    $region5: #{simple_dqn_forward.1} parent=1 // pred_fallthru
      _
    // Predicated region
    $region6: #{simple_dqn_forward.1} parent=1 // pred_check
      _
    $region7: #{simple_dqn_forward.1} parent=1 // pred_check_branch
      %14 = sbr.rel (0) target = $region9
    $region8: #{simple_dqn_forward.1} parent=1 // pred_region
      %s16 = ssub.s32 128, 128
      %17 = vsyncadd [#allocation3], %s16
      %s18 = sshll.u32 [#allocation2], 4
      %s19 = int_to_ptr.vmem [resolvable:$true] %s18
      %24 = dma.hbm_to_vmem [thread:$0]  %s1, 128, %s19, [#allocation3], 64, 64, 4
    $region9: #{simple_dqn_forward.1} parent=1 // pred_fallthru
      _
    // Predicated region
    $region10: #{simple_dqn_forward.1} parent=1 // pred_check
      _
    $region11: #{simple_dqn_forward.1} parent=1 // pred_check_branch
      %26 = sbr.rel (0) target = $region13
    $region12: #{simple_dqn_forward.1} parent=1 // pred_region
      _
    $region13: #{simple_dqn_forward.1} parent=1 // pred_fallthru
      _
    // Predicated region
    $region14: #{simple_dqn_forward.1} parent=1 // pred_check
      _
    $region15: #{simple_dqn_forward.1} parent=1 // pred_check_branch
      %28 = sbr.rel (0) target = $region17
    $region16: #{simple_dqn_forward.1} parent=1 // pred_region
      _
    $region17: #{simple_dqn_forward.1} parent=1 // pred_fallthru
      _
    // Predicated region
    $region18: #{simple_dqn_forward.1} parent=1 // pred_check
      _
    $region19: #{simple_dqn_forward.1} parent=1 // pred_check_branch
      %30 = sbr.rel (0) target = $region21
    $region20: #{simple_dqn_forward.1} parent=1 // pred_region
      _
    $region21: #{simple_dqn_forward.1} parent=1 // pred_fallthru
      _
    // Predicated region
    $region22: #{simple_dqn_forward.1} parent=1 // pred_check
      _
    $region23: #{simple_dqn_forward.1} parent=1 // pred_check_branch
      %32 = sbr.rel (0) target = $region25
    $region24: #{simple_dqn_forward.1} parent=1 // pred_region
      %33 = dma.done [#allocation3], 128
    $region25: #{simple_dqn_forward.1} parent=1 // pred_fallthru
      _
    %v36 = vld [vmem:[%s0] sm:$0xff]
    %v37 = vpack.c.bf16 %v36, %v36
    %v38 = vld [vmem:[#allocation2] sm:$0xf]
    %v39 = vld [vmem:[#allocation2 + $0x4] sm:$0xf]
    %v40 = vld [vmem:[%s2] sm:$0x1]
    %v42 = vlaneseq
    %v43 = vshrl.u32 %v42, 7
    %v44 = vsub.s32 0, %v43
    %v45 = vrot.slane %v40, %v44
    %v49 = vunpack.c.l.b16 %v38
    %v50 = vunpack.c.l.b16 %v39
    %v51 = vpack.c.b16 %v50, %v49
    %vm53 = vcmask 130048
    %v55 = vsel %vm53, %v37, 0
    %57 = vmatprep.subr.bf16.mxu0 0
    %58 = vmatpush1.bf16.msra.mxu0 %v51
    %59 = vmatprep.subr.bf16.mxu0 0
    %60 = vmatpush1.bf16.msra.mxu0 0
    %61 = vmatprep.subr.bf16.mxu0 0
    %62 = vmatpush1.bf16.msra.mxu0 0
    %63 = vmatprep.subr.bf16.mxu0 0
    %64 = vmatpush1.bf16.msra.mxu0 0
    %65 = vmatprep.subr.bf16.mxu0 0
    %66 = vmatpush1.bf16.msra.mxu0 0
    %67 = vmatprep.subr.bf16.mxu0 0
    %68 = vmatpush1.bf16.msra.mxu0 0
    %69 = vmatprep.subr.bf16.mxu0 0
    %70 = vmatpush1.bf16.msra.mxu0 0
    %71 = vmatprep.subr.bf16.mxu0 0
    %72 = vmatpush1.bf16.msra.mxu0 0
    %73 = vmatprep.subr.bf16.mxu0 0
    %74 = vmatpush1.bf16.msra.mxu0 0
    %75 = vmatprep.subr.bf16.mxu0 0
    %76 = vmatpush1.bf16.msra.mxu0 0
    %77 = vmatprep.subr.bf16.mxu0 0
    %78 = vmatpush1.bf16.msra.mxu0 0
    %79 = vmatprep.subr.bf16.mxu0 0
    %80 = vmatpush1.bf16.msra.mxu0 0
    %81 = vmatprep.subr.bf16.mxu0 0
    %82 = vmatpush1.bf16.msra.mxu0 0
    %83 = vmatprep.subr.bf16.mxu0 0
    %84 = vmatpush1.bf16.msra.mxu0 0
    %85 = vmatprep.subr.bf16.mxu0 0
    %86 = vmatpush1.bf16.msra.mxu0 0
    %87 = vmatprep.subr.bf16.mxu0 0
    %88 = vmatpush1.bf16.msra.mxu0 0
    %89 = vmatprep.mubr.bf16.mxu0 0
    %90 = vmatmul.mubr.bf16.gmra.mrb[0].mxu0 %v55
    %v91 = vpop.f32.mrb[0].mxu0
    %v92 = vadd.f32 %v45, %v91
    %v93 = vpop.f32.mrb[0].mxu0
    %v94 = vpop.f32.mrb[0].mxu0
    %v95 = vpop.f32.mrb[0].mxu0
    %96 = vdwg.mxu0
    %v97 = vpack.c.bf16 %v92, %v92
    %v98 = vxor.u32 %v97, 2147516416
    %v100 = vmul.bf16 %v98, 1069105081
    %v101 = vpow.bf16.pop %v100
    %v102 = vadd.bf16 %v101, 1065369472
    %v103 = vrcp.bf16.pop %v102
    %v104 = vmul.bf16 1065369472, %v103
    %v105 = vld [vmem:[%s3] sm:$0xf]
    %v106 = vld [vmem:[%s4] sm:$0xff]
    %108 = vset.pattern.permute.xlu0 0
    %109 = vperm.xlu0 %108, %v106
    %v110 = vpop.permute.xlu0 %109
    %112 = vmatprep.subr.bf16.mxu0 0
    %113 = vmatpush1.bf16.xpose.msra.mxu0 %v104
    %114 = vmatprep.subr.bf16.mxu0 0
    %115 = vmatpush1.bf16.xpose.msra.mxu0 0
    %116 = vmatprep.subr.bf16.mxu0 0
    %117 = vmatpush1.bf16.xpose.msra.mxu0 0
    %118 = vmatprep.subr.bf16.mxu0 0
    %119 = vmatpush1.bf16.xpose.msra.mxu0 0
    %120 = vmatprep.subr.bf16.mxu0 0
    %121 = vmatpush1.bf16.xpose.msra.mxu0 0
    %122 = vmatprep.subr.bf16.mxu0 0
    %123 = vmatpush1.bf16.xpose.msra.mxu0 0
    %124 = vmatprep.subr.bf16.mxu0 0
    %125 = vmatpush1.bf16.xpose.msra.mxu0 0
    %126 = vmatprep.subr.bf16.mxu0 0
    %127 = vmatpush1.bf16.xpose.msra.mxu0 0
    %128 = vmatprep.subr.bf16.mxu0 0
    %129 = vmatpush1.bf16.xpose.msra.mxu0 0
    %130 = vmatprep.subr.bf16.mxu0 0
    %131 = vmatpush1.bf16.xpose.msra.mxu0 0
    %132 = vmatprep.subr.bf16.mxu0 0
    %133 = vmatpush1.bf16.xpose.msra.mxu0 0
    %134 = vmatprep.subr.bf16.mxu0 0
    %135 = vmatpush1.bf16.xpose.msra.mxu0 0
    %136 = vmatprep.subr.bf16.mxu0 0
    %137 = vmatpush1.bf16.xpose.msra.mxu0 0
    %138 = vmatprep.subr.bf16.mxu0 0
    %139 = vmatpush1.bf16.xpose.msra.mxu0 0
    %140 = vmatprep.subr.bf16.mxu0 0
    %141 = vmatpush1.bf16.xpose.msra.mxu0 0
    %142 = vmatprep.subr.bf16.mxu0 0
    %143 = vmatpush1.bf16.xpose.msra.mxu0 0
    %144 = vmatprep.mubr.bf16.mxu0 0
    %145 = vmatmul.mubr.bf16.gmra.mrb[0].mxu0 %v105
    %v146 = vpop.f32.mrb[0].mxu0
    %v147 = vadd.f32 %v110, %v146
    %v148 = vpop.f32.mrb[0].mxu0
    %v149 = vpop.f32.mrb[0].mxu0
    %v150 = vpop.f32.mrb[0].mxu0
    %151 = vdwg.mxu0
    %vm152 = vcmask 64512
    %153 = vst.msk [vmem:[%s5] sm:$0xff] %vm152, %v147
    // Predicated region
    $region26: #{simple_dqn_forward.1} parent=1 // pred_check
      _
    $region27: #{simple_dqn_forward.1} parent=1 // pred_check_branch
      %155 = sbr.rel (0) target = $region29
    $region28: #{simple_dqn_forward.1} parent=1 // pred_region
      _
    $region29: #{simple_dqn_forward.1} parent=1 // pred_fallthru
      _
    // Predicated region
    $region30: #{simple_dqn_forward.1} parent=1 // pred_check
      _
    $region31: #{simple_dqn_forward.1} parent=1 // pred_check_branch
      %157 = sbr.rel (0) target = $region33
    $region32: #{simple_dqn_forward.1} parent=1 // pred_region
      _
    $region33: #{simple_dqn_forward.1} parent=1 // pred_fallthru
      _
    %158 = vsyncpa [#allocation3], 1

</llo_original>
